<compile_context>
chip_gen: v7x
topology: tpu7x:2x2x1
jax: 0.10.0
libtpu: 0.0.40
codegen_flags: <defaults>
</compile_context>

<pallas_src>
import functools
import math

import jax
import jax.numpy as jnp
from jax import lax
from jax.experimental import pallas as pl
from jax.experimental.pallas import tpu as pltpu


def _proj_kernel(x_ref, w_ref, b_ref, o_ref):
    """Fused im2col + patch projection for one row tile.

    x_ref: (tr, p, Wo, p*C_in)   input rows; kh separate, (kw, C_in) fused in lanes
    w_ref: (p*p*C_in, N_pad)     bf16 projection weight (resident across the grid)
    b_ref: (1, N_pad)            f32 bias row
    o_ref: (tr*Wo, N_pad)        2-D lane-dense output tile (no store-path reshape)
    """
    tr, p, wo, kc = x_ref.shape
    # im2col: put the p kh-rows side by side along the lane dim (once, in bf16).
    parts = [x_ref[:, kh, :, :].astype(jnp.bfloat16) for kh in range(p)]
    xs = parts[0] if p == 1 else jnp.concatenate(parts, axis=-1)   # (tr, Wo, p*p*C_in)
    xs = xs.reshape(tr * wo, p * kc)                               # single sublane relayout
    # One MXU matmul over the full K; bias folded into the store expression.
    acc = jnp.dot(xs, w_ref[...], preferred_element_type=jnp.float32)
    o_ref[...] = (acc + b_ref[...]).astype(o_ref.dtype)


def _vmem_capacity_bytes():
    """Physical VMEM for this generation (conservative fallback = v7x's 64 MiB)."""
    try:
        info = pltpu.get_tpu_info()
        for attr in ("vmem_capacity_bytes", "vmem_size_bytes", "vmem_bytes"):
            v = getattr(info, attr, None)
            if v:
                return int(v)
    except Exception:
        pass
    return 64 * 1024 * 1024


@functools.partial(jax.jit, static_argnames=("patch_size",))
def downsample(x, weight, bias, *, patch_size):
    """x: (B, H, W, C_in) NHWC.  weight: (C_out, C_in, p, p) (PyTorch Conv2d layout).
    bias: (C_out,).  Returns (B, H//p, W//p, C_out) NHWC."""
    B, H, W, C_in = x.shape
    C_out = weight.shape[0]
    p = patch_size
    if H % p or W % p:
        # PyTorch's strided conv would silently drop the remainder; we require divisibility.
        raise ValueError("H and W must be divisible by patch_size")
    Ho, Wo = H // p, W // p
    rows = B * Ho

    # ---- pure-view reshape (no HBM copy): (B,H,W,C) -> (B*Ho, p, Wo, p*C_in) ----
    kc = p * C_in
    K = p * kc
    x5 = x.reshape(rows, p, Wo, kc)

    # ---- weight (C_out,C_in,kh,kw) -> (kh*kw*C_in, C_out); bf16; lane-pad N only ----
    N = C_out
    N_pad = 128 * pl.cdiv(N, 128)                      # lane-dense, unmasked stores
    w2 = weight.transpose(2, 3, 1, 0).reshape(K, N)    # (kh, kw, C_in) flattened -> K
    if N_pad != N:
        w2 = jnp.pad(w2, ((0, 0), (0, N_pad - N)))
        b_row = jnp.pad(bias, (0, N_pad - N)).reshape(1, N_pad)
    else:
        b_row = bias.reshape(1, N_pad)
    w2 = w2.astype(jnp.bfloat16)
    b_row = b_row.astype(jnp.float32)

    # ---- trace-time VMEM accounting: tiles + accumulator + lhs temps + weight ----
    itemsize = jnp.dtype(x.dtype).itemsize
    sub_wo = 8 * pl.cdiv(Wo, 8)
    lane_kc = 128 * pl.cdiv(kc, 128)
    lane_k = 128 * pl.cdiv(K, 128)
    w_bytes = 2 * (8 * pl.cdiv(K, 8)) * N_pad * 2      # double-buffered resident bf16 weight

    def step_bytes(tr):
        m = 8 * pl.cdiv(tr * Wo, 8)
        x_tile = tr * p * sub_wo * lane_kc * itemsize  # one x buffer
        o_tile = m * N_pad * itemsize                  # one out buffer
        acc = m * N_pad * 4                            # f32 matmul accumulator
        lhs = 2 * m * lane_k * 2                       # bf16 concat + reshape temporaries
        return 2 * x_tile + 2 * o_tile + acc + lhs + w_bytes + (64 << 10)

    vmem_cap = _vmem_capacity_bytes()
    budget = min(vmem_cap // 3, 24 * 1024 * 1024)

    # ---- row-tile: largest divisor of `rows` (no ragged padding -> no extra HBM
    # pass) that is sublane-legal, fits the budget and keeps <= ~4k output
    # positions per step; prefer an even number of grid steps (two v7x TCs). ----
    align = 8 // math.gcd(Wo, 8)                       # smallest tr with (tr*Wo) % 8 == 0
    cap = min(rows, max(1, 4096 // max(Wo, 1)))

    def legal(d):
        return (d * Wo) % 8 == 0 or d == rows          # full-extent block always legal

    candidates = [d for d in range(1, cap + 1)
                  if rows % d == 0 and legal(d) and step_bytes(d) <= budget]
    even = [d for d in candidates if (rows // d) % 2 == 0]

    rows_pad = rows
    if even:
        tr = max(even)
    elif candidates:
        tr = max(candidates)
    else:
        # Corner case (never hit for VOLO shapes): no legal divisor fits -> smallest
        # sublane-legal tile + row padding (costs one extra HBM pass over x).
        tr = min(align, rows)
        rows_pad = tr * pl.cdiv(rows, tr)
        x5 = jnp.pad(x5, ((0, rows_pad - rows), (0, 0), (0, 0), (0, 0)))
    grid0 = rows_pad // tr

    vmem_limit = max(step_bytes(tr) + (8 << 20), 24 << 20)
    vmem_limit = min(vmem_limit, vmem_cap - (8 << 20))
    vmem_limit = max(vmem_limit, 16 << 20)

    out = pl.pallas_call(
        _proj_kernel,
        out_shape=jax.ShapeDtypeStruct((rows_pad * Wo, N_pad), x.dtype),
        grid_spec=pltpu.PrefetchScalarGridSpec(
            num_scalar_prefetch=0,
            grid=(grid0,),
            in_specs=[
                # x rows: blocked leading dim; im2col finishes in-kernel.
                # (If profiling shows exposed input DMA on v6e, add
                #  pipeline_mode=pl.Buffered(3) here and re-derive the budget.)
                pl.BlockSpec((tr, p, Wo, kc), lambda i: (i, 0, 0, 0)),
                pl.BlockSpec((K, N_pad), lambda i: (0, 0)),       # resident weight
                pl.BlockSpec((1, N_pad), lambda i: (0, 0)),       # bias row
            ],
            out_specs=pl.BlockSpec((tr * Wo, N_pad), lambda i: (i, 0)),
        ),
        compiler_params=pltpu.CompilerParams(
            dimension_semantics=("parallel",),
            vmem_limit_bytes=int(vmem_limit),
        ),
    )(x5, w2, b_row)

    out = out[:rows * Wo, :N]                          # drop row / lane padding (often a no-op)
    return out.reshape(B, Ho, Wo, N)


def _reference(x, weight, bias, patch_size):
    # Pure-JAX reference: NHWC conv with stride = kernel = patch_size (f32).
    w = weight.transpose(2, 3, 1, 0)                   # (kh, kw, C_in, C_out)
    y = lax.conv_general_dilated(
        x.astype(jnp.float32), w.astype(jnp.float32),
        window_strides=(patch_size, patch_size), padding="VALID",
        dimension_numbers=("NHWC", "HWIO", "NHWC"))
    return y + bias.reshape(1, 1, 1, -1)


if __name__ == "__main__":
    key = jax.random.PRNGKey(0)
    k_x, k_w, k_b = jax.random.split(key, 3)

    B, H, W = 2, 16, 16
    in_dim, out_dim, patch = 4, 8, 2

    x = jax.random.normal(k_x, (B, H, W, in_dim), dtype=jnp.float32)
    # Deterministic synthetic Conv2d params (PyTorch layout: (C_out, C_in, kh, kw)).
    weight = jax.random.normal(k_w, (out_dim, in_dim, patch, patch), dtype=jnp.float32) * 0.1
    bias = jax.random.normal(k_b, (out_dim,), dtype=jnp.float32) * 0.1

    out = downsample(x, weight, bias, patch_size=patch)
    out = jax.block_until_ready(out)

    ref = _reference(x, weight, bias, patch)
    assert out.shape == (B, H // patch, W // patch, out_dim), out.shape
    # bf16 MXU inputs with f32 accumulation -> loosened tolerance vs f32 reference.
    assert jnp.allclose(out, ref, atol=2e-2, rtol=2e-2), "mismatch vs reference conv"

    print("KERNEL_OK")
</pallas_src>

<mosaic_0001>
module attributes {stable_mosaic.version = 11 : i64} {
  func.func @_proj_kernel(%arg0: i32, %arg1: memref<8x2x8x8xf32, #tpu.memory_space<vmem>>, %arg2: memref<16x128xbf16, #tpu.memory_space<vmem>>, %arg3: memref<1x128xf32, #tpu.memory_space<vmem>>, %arg4: memref<64x128xf32, #tpu.memory_space<vmem>>) attributes {dimension_semantics = [#tpu.dimension_semantics<parallel>], iteration_bounds = array<i64: 2>, scalar_prefetch = 0 : i64, scratch_operands = 0 : i64, tpu.core_type = #tpu.core_type<tc>, window_params = [{transform_indices = @transform_0, window_bounds = array<i64: 8, 2, 8, 8>}, {pipeline_mode = #tpu.pipeline_mode<synchronous>, transform_indices = @transform_1, window_bounds = array<i64: 16, 128>}, {pipeline_mode = #tpu.pipeline_mode<synchronous>, transform_indices = @transform_2, window_bounds = array<i64: 1, 128>}, {transform_indices = @transform_3, window_bounds = array<i64: 64, 128>}]} {
    %c0 = arith.constant 0 : index
    %c0_0 = arith.constant 0 : index
    %c0_1 = arith.constant 0 : index
    %c0_2 = arith.constant 0 : index
    %0 = vector.load %arg1[%c0, %c0_0, %c0_1, %c0_2] : memref<8x2x8x8xf32, #tpu.memory_space<vmem>>, vector<8x1x8x8xf32>
    %1 = vector.shape_cast %0 : vector<8x1x8x8xf32> to vector<8x8x8xf32>
    %2 = arith.truncf %1 : vector<8x8x8xf32> to vector<8x8x8xbf16>
    %c0_3 = arith.constant 0 : index
    %c1 = arith.constant 1 : index
    %c0_4 = arith.constant 0 : index
    %c0_5 = arith.constant 0 : index
    %3 = vector.load %arg1[%c0_3, %c1, %c0_4, %c0_5] : memref<8x2x8x8xf32, #tpu.memory_space<vmem>>, vector<8x1x8x8xf32>
    %4 = vector.shape_cast %3 : vector<8x1x8x8xf32> to vector<8x8x8xf32>
    %5 = arith.truncf %4 : vector<8x8x8xf32> to vector<8x8x8xbf16>
    %6 = tpu.concatenate %2, %5 in 2 : vector<8x8x8xbf16>, vector<8x8x8xbf16> -> vector<8x8x16xbf16>
    %7 = vector.shape_cast %6 : vector<8x8x16xbf16> to vector<64x16xbf16>
    %c0_6 = arith.constant 0 : index
    %c0_7 = arith.constant 0 : index
    %8 = vector.load %arg2[%c0_6, %c0_7] : memref<16x128xbf16, #tpu.memory_space<vmem>>, vector<16x128xbf16>
    %cst = arith.constant dense<0.000000e+00> : vector<64x128xf32>
    %9 = tpu.matmul %7, %8, %cst {dimension_numbers = #tpu.dot_dimension_numbers<[1], [0], [0], [1], [0, 0, 1, 1], [], []>} : vector<64x16xbf16>, vector<16x128xbf16>, vector<64x128xf32> -> vector<64x128xf32>
    %c0_8 = arith.constant 0 : index
    %c0_9 = arith.constant 0 : index
    %10 = vector.load %arg3[%c0_8, %c0_9] : memref<1x128xf32, #tpu.memory_space<vmem>>, vector<1x128xf32>
    %11 = vector.broadcast %10 : vector<1x128xf32> to vector<64x128xf32>
    %12 = arith.addf %9, %11 : vector<64x128xf32>
    %c0_10 = arith.constant 0 : index
    %c0_11 = arith.constant 0 : index
    %13 = vector.load %arg4[%c0_10, %c0_11] : memref<64x128xf32, #tpu.memory_space<vmem>>, vector<64x128xf32>
    tpu.vector_store %arg4[%c0_10, %c0_11], %12 {strides = array<i32>} : memref<64x128xf32, #tpu.memory_space<vmem>>, vector<64x128xf32>,
    return
  }
  func.func @transform_0(%arg0: i32) -> (i32, i32, i32, i32) {
    %c0_i32 = arith.constant 0 : i32
    %c0_i32_0 = arith.constant 0 : i32
    %c0_i32_1 = arith.constant 0 : i32
    %c0_i32_2 = arith.constant 0 : i32
    return %arg0, %c0_i32, %c0_i32_0, %c0_i32_1 : i32, i32, i32, i32
  }
  func.func @transform_1(%arg0: i32) -> (i32, i32) {
    %c0_i32 = arith.constant 0 : i32
    %c0_i32_0 = arith.constant 0 : i32
    %c0_i32_1 = arith.constant 0 : i32
    return %c0_i32, %c0_i32_0 : i32, i32
  }
  func.func @transform_2(%arg0: i32) -> (i32, i32) {
    %c0_i32 = arith.constant 0 : i32
    %c0_i32_0 = arith.constant 0 : i32
    %c0_i32_1 = arith.constant 0 : i32
    return %c0_i32, %c0_i32_0 : i32, i32
  }
  func.func @transform_3(%arg0: i32) -> (i32, i32) {
    %c0_i32 = arith.constant 0 : i32
    %c0_i32_0 = arith.constant 0 : i32
    return %arg0, %c0_i32 : i32, i32
  }
}

</mosaic_0001>

<llo_original>
// kernel: downsample.1
$region0: #{downsample.1}
  #allocation0 [shape = 'u32[]', space=smem, size = 0x4, offset = 0x4, fixed_abs, tag = 'smem constant byte address 0x4 - core index']
  #allocation1 [shape = 'u32[144,128]{1,0:T(1,128)}', space=vmem, size = 0x12000, scoped, tag = 'internal scratch']
  %s0 = inlined_call_operand.vmem [shape: f32[16,2,8,8], index: 0, kind: input, shape index: {}]
  %s1 = inlined_call_operand.vmem [shape: bf16[16,128], index: 1, kind: input, shape index: {}]
  %s2 = inlined_call_operand.vmem [shape: f32[1,128], index: 2, kind: input, shape index: {}]
  %s3 = inlined_call_operand.hbm [shape: f32[128,128], index: 3, kind: output, shape index: {}]
  %s4 = sld [smem:[#allocation0]]
  $region45: #{downsample.1} parent=0
    _
  %s6 = ssub.s32 1, %s4
  %s7 = scalar_select 0, %s6, %s4
  $region1: #{downsample.1} parent=0
    #allocation2 [shape = 'u8[65536]{0}', space=vmem, size = 0x10000, scoped, tag = 'output window, operand 0']
    #allocation3 [shape = 's32[2]{0}', space=sflag, size = 0x8, scoped, tag = 'scoped memory for downsample.1']
    %8 = vsyncpa [#allocation3], 0
    %s9 = scalar_lea.sflag [#allocation3], 1
    %10 = vsyncpa %s9, 0
    loop: start=0, step=1, limit=4
    $region2: #{downsample.1} parent=1 // loop_pre_header
      _
    $region3: #{downsample.1} parent=1 // loop_header
      %s12 = sphi 0, %s16
      %p13 = scmp.ge.s32.totalorder %s12, 4
      %s22 = sphi 0, %s24
      %s25 = sphi 0, %s22
      %s26 = sphi 0, %s25
      %s42 = sphi 0, %s26
      %s46 = sphi 0, %s46
      %s48 = sphi 0, %s46
      %s49 = sphi 0, %s48
      %s63 = sphi 0, %s49
      %s67 = sphi 0, %s67
      %s69 = sphi 0, %s67
      %s70 = sphi 0, %s69
      %s84 = sphi 0, %s70
      %s90 = sphi 0, %s92
      %s93 = sphi 0, %s90
      %s94 = sphi 0, %s93
      %s110 = sphi 0, %s94
    $region4: #{downsample.1} parent=1 // loop_header_branch
      %15 = sbr.rel (%p13) target = $region8
    $region5: #{downsample.1} parent=1 // loop_body
      %s17 = ssub.s32 %s12, 1
      %s18 = ssub.s32 %s12, 2
      %s19 = sadd.s32 %s12, 1
      %s20 = ssub.s32 %s12, %s19
      %p21 = scmp.eq.s32.totalorder %s20, 0
      %s23 = sadd.s32 %s22, 1
      %s24 = scalar_select %p21, %s22, %s23
      %p27 = pneg %p21
      %p28 = scmp.eq.s32.totalorder %s12, 1
      %p29 = por %p27, %p28
      %p30 = scmp.ne.s32.totalorder %s22, %s25
      %p31 = scmp.eq.s32.totalorder %s12, 0
      %p32 = por %p30, %p31
      %p33 = scmp.ne.s32.totalorder %s22, %s25
      %p34 = scmp.eq.s32.totalorder %s17, 1
      %p35 = por %p33, %p34
      %p36 = scmp.ne.s32.totalorder %s25, %s26
      %p37 = scmp.eq.s32.totalorder %s17, 0
      %p38 = por %p36, %p37
      %p39 = scmp.ne.s32.totalorder %s25, %s26
      %p40 = scmp.eq.s32.totalorder %s18, 1
      %p41 = por %p39, %p40
      %p43 = scmp.ne.s32.totalorder %s26, %s42
      %p44 = scmp.eq.s32.totalorder %s18, 0
      %p45 = por %p43, %p44
      %s47 = sadd.s32 %s46, 1
      %p50 = scmp.eq.s32.totalorder %s12, 1
      %p51 = scmp.ne.s32.totalorder %s46, %s48
      %p52 = scmp.eq.s32.totalorder %s12, 0
      %p53 = por %p51, %p52
      %p54 = scmp.ne.s32.totalorder %s46, %s48
      %p55 = scmp.eq.s32.totalorder %s17, 1
      %p56 = por %p54, %p55
      %p57 = scmp.ne.s32.totalorder %s48, %s49
      %p58 = scmp.eq.s32.totalorder %s17, 0
      %p59 = por %p57, %p58
      %p60 = scmp.ne.s32.totalorder %s48, %s49
      %p61 = scmp.eq.s32.totalorder %s18, 1
      %p62 = por %p60, %p61
      %p64 = scmp.ne.s32.totalorder %s49, %s63
      %p65 = scmp.eq.s32.totalorder %s18, 0
      %p66 = por %p64, %p65
      %s68 = sadd.s32 %s67, 1
      %p71 = scmp.eq.s32.totalorder %s12, 1
      %p72 = scmp.ne.s32.totalorder %s67, %s69
      %p73 = scmp.eq.s32.totalorder %s12, 0
      %p74 = por %p72, %p73
      %p75 = scmp.ne.s32.totalorder %s67, %s69
      %p76 = scmp.eq.s32.totalorder %s17, 1
      %p77 = por %p75, %p76
      %p78 = scmp.ne.s32.totalorder %s69, %s70
      %p79 = scmp.eq.s32.totalorder %s17, 0
      %p80 = por %p78, %p79
      %p81 = scmp.ne.s32.totalorder %s69, %s70
      %p82 = scmp.eq.s32.totalorder %s18, 1
      %p83 = por %p81, %p82
      %p85 = scmp.ne.s32.totalorder %s70, %s84
      %p86 = scmp.eq.s32.totalorder %s18, 0
      %p87 = por %p85, %p86
      %s88 = ssub.s32 %s12, %s19
      %p89 = scmp.eq.s32.totalorder %s88, 0
      %s91 = sadd.s32 %s90, 1
      %s92 = scalar_select %p89, %s90, %s91
      %p95 = pneg %p89
      %p96 = scmp.eq.s32.totalorder %s12, 1
      %p97 = por %p95, %p96
      %p98 = scmp.ne.s32.totalorder %s90, %s93
      %p99 = scmp.eq.s32.totalorder %s12, 0
      %p100 = por %p98, %p99
      %p101 = scmp.ne.s32.totalorder %s90, %s93
      %p102 = scmp.eq.s32.totalorder %s17, 1
      %p103 = por %p101, %p102
      %p104 = scmp.ne.s32.totalorder %s93, %s94
      %p105 = scmp.eq.s32.totalorder %s17, 0
      %p106 = por %p104, %p105
      %p107 = scmp.ne.s32.totalorder %s93, %s94
      %p108 = scmp.eq.s32.totalorder %s18, 1
      %p109 = por %p107, %p108
      %p111 = scmp.ne.s32.totalorder %s94, %s110
      %p112 = scmp.eq.s32.totalorder %s18, 0
      %p113 = por %p111, %p112
      %p114 = scmp.le.s32.totalorder 1, %s12
      %p115 = scmp.lt.s32.totalorder %s12, 3
      %p116 = pnand %p114, %p115
      %p117 = pneg %p116
      // Predicated region
      $region9: #{downsample.1} parent=5 // pred_check
        _
      $region10: #{downsample.1} parent=5 // pred_check_branch
        %119 = sbr.rel (%p116) target = $region12
      $region11: #{downsample.1} parent=5 // pred_region
        %s120 = ssub.s32 %s12, 1
        // Predicated region
        $region13: #{downsample.1} parent=11 // pred_check
          %p121 = pneg %p59
        $region14: #{downsample.1} parent=11 // pred_check_branch
          %123 = sbr.rel (%p121) target = $region16
        $region15: #{downsample.1} parent=11 // pred_region
          _
        $region16: #{downsample.1} parent=11 // pred_fallthru
          _
        // Predicated region
        $region17: #{downsample.1} parent=11 // pred_check
          %p124 = pneg %p80
        $region18: #{downsample.1} parent=11 // pred_check_branch
          %126 = sbr.rel (%p124) target = $region20
        $region19: #{downsample.1} parent=11 // pred_region
          _
        $region20: #{downsample.1} parent=11 // pred_fallthru
          _
      $region12: #{downsample.1} parent=5 // pred_fallthru
        _
      %p127 = scmp.lt.s32.totalorder %s12, 2
      // Predicated region
      $region21: #{downsample.1} parent=5 // pred_check
        %p128 = pneg %p127
      $region22: #{downsample.1} parent=5 // pred_check_branch
        %130 = sbr.rel (%p128) target = $region24
      $region23: #{downsample.1} parent=5 // pred_region
        // Predicated region
        $region25: #{downsample.1} parent=23 // pred_check
          %p131 = pneg %p32
        $region26: #{downsample.1} parent=23 // pred_check_branch
          %133 = sbr.rel (%p131) target = $region28
        $region27: #{downsample.1} parent=23 // pred_region
          %s134 = smul.u32 8, %s12
          %p135 = scmp.lt.s32.totalorder %s134, 15
          %s136 = scalar_select %p135, %s134, 15
          %s137 = smul.addr %s136, 2
          %s138 = smul.addr %s137, 8
          %s139 = scalar_lea.vmem %s0, %s138
          %s140 = smul.u32 8, %s12
        $region28: #{downsample.1} parent=23 // pred_fallthru
          _
      $region24: #{downsample.1} parent=5 // pred_fallthru
        _
      %p141 = scmp.le.s32.totalorder 1, %s12
      %p142 = scmp.lt.s32.totalorder %s12, 3
      %p143 = pnand %p141, %p142
      %p144 = pneg %p143
      // Predicated region
      $region29: #{downsample.1} parent=5 // pred_check
        _
      $region30: #{downsample.1} parent=5 // pred_check_branch
        %146 = sbr.rel (%p143) target = $region32
      $region31: #{downsample.1} parent=5 // pred_region
        %s147 = ssub.s32 %s12, 1
        %s148 = smul.u32 8, %s17
        %p149 = scmp.lt.s32.totalorder %s148, 15
        %s150 = scalar_select %p149, %s148, 15
        %s151 = smul.addr %s150, 2
        %s152 = smul.addr %s151, 8
        %s153 = scalar_lea.vmem %s0, %s152
        %p154 = pneg %p38
        %p155 = pneg %p35
        %p156 = pneg %p59
        %p157 = pneg %p56
        %p158 = pneg %p80
        %p159 = pneg %p77
        %p160 = pneg %p106
        %p161 = pneg %p103
        %s162 = sand.u32 %s93, 1
        %s163 = scalar_lea.sflag [#allocation3], %s162
        %s164 = sand.u32 %s93, 1
        %s165 = smul.addr %s164, 64
        %s166 = scalar_lea.vmem [#allocation2], %s165
        %s167 = smul.u32 8, %s17
        %p168 = scmp.lt.s32.totalorder %s167, 15
        %s169 = scalar_select %p168, %s167, 15
        %s170 = smul.addr %s169, 2
        %s171 = smul.addr %s170, 8
        %s172 = scalar_lea.vmem %s0, %s171
        %s173 = smul.u32 8, %s17
        %s174 = smul.u32 8, %s17
        %v176 = vld [vmem:[%s172] sm:$0xff]
        %v177 = vld [vmem:[%s172 + $0x10] sm:$0xff]
        %v178 = vld [vmem:[%s172 + $0x20] sm:$0xff]
        %v179 = vld [vmem:[%s172 + $0x30] sm:$0xff]
        %v180 = vld [vmem:[%s172 + $0x40] sm:$0xff]
        %v181 = vld [vmem:[%s172 + $0x50] sm:$0xff]
        %v182 = vld [vmem:[%s172 + $0x60] sm:$0xff]
        %v183 = vld [vmem:[%s172 + $0x70] sm:$0xff]
        %v184 = vpack.c.bf16 %v176, %v176
        %v185 = vpack.c.bf16 %v177, %v177
        %v186 = vpack.c.bf16 %v178, %v178
        %v187 = vpack.c.bf16 %v179, %v179
        %v188 = vpack.c.bf16 %v180, %v180
        %v189 = vpack.c.bf16 %v181, %v181
        %v190 = vpack.c.bf16 %v182, %v182
        %v191 = vpack.c.bf16 %v183, %v183
        %s192 = scalar_lea.vmem %s172, 8
        %v193 = vld [vmem:[%s192] sm:$0xff]
        %v194 = vld [vmem:[%s192 + $0x10] sm:$0xff]
        %v195 = vld [vmem:[%s192 + $0x20] sm:$0xff]
        %v196 = vld [vmem:[%s192 + $0x30] sm:$0xff]
        %v197 = vld [vmem:[%s192 + $0x40] sm:$0xff]
        %v198 = vld [vmem:[%s192 + $0x50] sm:$0xff]
        %v199 = vld [vmem:[%s192 + $0x60] sm:$0xff]
        %v200 = vld [vmem:[%s192 + $0x70] sm:$0xff]
        %v201 = vpack.c.bf16 %v193, %v193
        %v202 = vpack.c.bf16 %v194, %v194
        %v203 = vpack.c.bf16 %v195, %v195
        %v204 = vpack.c.bf16 %v196, %v196
        %v205 = vpack.c.bf16 %v197, %v197
        %v206 = vpack.c.bf16 %v198, %v198
        %v207 = vpack.c.bf16 %v199, %v199
        %v208 = vpack.c.bf16 %v200, %v200
        %217 = vrot.lane.b32.xlu0 %v201, 8
        %v218 = vpop.permute.xlu0 %217
        %219 = vrot.lane.b32.xlu0 %v202, 8
        %v220 = vpop.permute.xlu0 %219
        %221 = vrot.lane.b32.xlu0 %v203, 8
        %v222 = vpop.permute.xlu0 %221
        %223 = vrot.lane.b32.xlu0 %v204, 8
        %v224 = vpop.permute.xlu0 %223
        %225 = vrot.lane.b32.xlu0 %v205, 8
        %v226 = vpop.permute.xlu0 %225
        %227 = vrot.lane.b32.xlu0 %v206, 8
        %v228 = vpop.permute.xlu0 %227
        %229 = vrot.lane.b32.xlu0 %v207, 8
        %v230 = vpop.permute.xlu0 %229
        %231 = vrot.lane.b32.xlu0 %v208, 8
        %v232 = vpop.permute.xlu0 %231
        %vm233 = vcmask 64512
        %v236 = vsel %vm233, %v184, %v218
        %v239 = vsel %vm233, %v185, %v220
        %v242 = vsel %vm233, %v186, %v222
        %v245 = vsel %vm233, %v187, %v224
        %v248 = vsel %vm233, %v188, %v226
        %v251 = vsel %vm233, %v189, %v228
        %v254 = vsel %vm233, %v190, %v230
        %v257 = vsel %vm233, %v191, %v232
        %v258 = vld [vmem:[%s1] sm:$0xf]
        %v259 = vld [vmem:[%s1 + $0x4] sm:$0xf]
        %v260 = vld [vmem:[%s2] sm:$0x1]
        %v262 = vlaneseq
        %v263 = vshrl.u32 %v262, 7
        %v264 = vsub.s32 0, %v263
        %v265 = vrot.slane %v260, %v264
        %v275 = vunpack.c.l.b16 %v236
        %v276 = vunpack.c.l.b16 %v239
        %v277 = vunpack.c.l.b16 %v242
        %v278 = vunpack.c.l.b16 %v245
        %v279 = vunpack.c.l.b16 %v248
        %v280 = vunpack.c.l.b16 %v251
        %v281 = vunpack.c.l.b16 %v254
        %v282 = vunpack.c.l.b16 %v257
        %v283 = vpack.c.b16 %v276, %v275
        %v284 = vpack.c.b16 %v278, %v277
        %v285 = vpack.c.b16 %v280, %v279
        %v286 = vpack.c.b16 %v282, %v281
        %v289 = vunpack.c.l.b16 %v258
        %v290 = vunpack.c.l.b16 %v259
        %v291 = vpack.c.b16 %v290, %v289
        %vm293 = vcmask 130048
        %v295 = vsel %vm293, %v283, 0
        %v298 = vsel %vm293, %v284, 0
        %v301 = vsel %vm293, %v285, 0
        %v304 = vsel %vm293, %v286, 0
        %306 = vmatprep.subr.bf16.mxu0 0
        %307 = vmatpush1.bf16.msra.mxu0 %v291
        %308 = vmatprep.subr.bf16.mxu0 0
        %309 = vmatpush1.bf16.msra.mxu0 0
        %310 = vmatprep.subr.bf16.mxu0 0
        %311 = vmatpush1.bf16.msra.mxu0 0
        %312 = vmatprep.subr.bf16.mxu0 0
        %313 = vmatpush1.bf16.msra.mxu0 0
        %314 = vmatprep.subr.bf16.mxu0 0
        %315 = vmatpush1.bf16.msra.mxu0 0
        %316 = vmatprep.subr.bf16.mxu0 0
        %317 = vmatpush1.bf16.msra.mxu0 0
        %318 = vmatprep.subr.bf16.mxu0 0
        %319 = vmatpush1.bf16.msra.mxu0 0
        %320 = vmatprep.subr.bf16.mxu0 0
        %321 = vmatpush1.bf16.msra.mxu0 0
        %322 = vmatprep.subr.bf16.mxu0 0
        %323 = vmatpush1.bf16.msra.mxu0 0
        %324 = vmatprep.subr.bf16.mxu0 0
        %325 = vmatpush1.bf16.msra.mxu0 0
        %326 = vmatprep.subr.bf16.mxu0 0
        %327 = vmatpush1.bf16.msra.mxu0 0
        %328 = vmatprep.subr.bf16.mxu0 0
        %329 = vmatpush1.bf16.msra.mxu0 0
        %330 = vmatprep.subr.bf16.mxu0 0
        %331 = vmatpush1.bf16.msra.mxu0 0
        %332 = vmatprep.subr.bf16.mxu0 0
        %333 = vmatpush1.bf16.msra.mxu0 0
        %334 = vmatprep.subr.bf16.mxu0 0
        %335 = vmatpush1.bf16.msra.mxu0 0
        %336 = vmatprep.subr.bf16.mxu0 0
        %337 = vmatpush1.bf16.msra.mxu0 0
        %338 = vmatprep.mubr.bf16.mxu0 0
        %339 = vmatmul.mubr.bf16.gmra.mrb[0].mxu0 %v295
        %v340 = vpop.f32.mrb[0].mxu0
        %v341 = vadd.f32 %v265, %v340
        %v342 = vpop.f32.mrb[0].mxu0
        %v343 = vpop.f32.mrb[0].mxu0
        %v344 = vadd.f32 %v265, %v343
        %v345 = vpop.f32.mrb[0].mxu0
        %346 = vmatprep.mubr.bf16.mxu0 0
        %347 = vmatmul.mubr.bf16.gmra.mrb[0].mxu0 %v298
        %v348 = vpop.f32.mrb[0].mxu0
        %v349 = vadd.f32 %v265, %v348
        %v350 = vpop.f32.mrb[0].mxu0
        %v351 = vpop.f32.mrb[0].mxu0
        %v352 = vadd.f32 %v265, %v351
        %v353 = vpop.f32.mrb[0].mxu0
        %354 = vmatprep.mubr.bf16.mxu0 0
        %355 = vmatmul.mubr.bf16.gmra.mrb[0].mxu0 %v301
        %v356 = vpop.f32.mrb[0].mxu0
        %v357 = vadd.f32 %v265, %v356
        %v358 = vpop.f32.mrb[0].mxu0
        %v359 = vpop.f32.mrb[0].mxu0
        %v360 = vadd.f32 %v265, %v359
        %v361 = vpop.f32.mrb[0].mxu0
        %362 = vmatprep.mubr.bf16.mxu0 0
        %363 = vmatmul.mubr.bf16.gmra.mrb[0].mxu0 %v304
        %v364 = vpop.f32.mrb[0].mxu0
        %v365 = vadd.f32 %v265, %v364
        %v366 = vpop.f32.mrb[0].mxu0
        %v367 = vpop.f32.mrb[0].mxu0
        %v368 = vadd.f32 %v265, %v367
        %v369 = vpop.f32.mrb[0].mxu0
        %370 = vdwg.mxu0
        %371 = vst [vmem:[%s166] sm:$0xff] %v341
        %372 = vst [vmem:[%s166 + $0x8] sm:$0xff] %v344
        %373 = vst [vmem:[%s166 + $0x10] sm:$0xff] %v349
        %374 = vst [vmem:[%s166 + $0x18] sm:$0xff] %v352
        %375 = vst [vmem:[%s166 + $0x20] sm:$0xff] %v357
        %376 = vst [vmem:[%s166 + $0x28] sm:$0xff] %v360
        %377 = vst [vmem:[%s166 + $0x30] sm:$0xff] %v365
        %378 = vst [vmem:[%s166 + $0x38] sm:$0xff] %v368
        %s379 = sand.u32 %s93, 1
        %s380 = scalar_lea.sflag [#allocation3], %s379
        %s381 = sand.u32 %s93, 1
        %s382 = smul.addr %s381, 64
        %s383 = scalar_lea.vmem [#allocation2], %s382
        // Predicated region
        $region33: #{downsample.1} parent=31 // pred_check
          %p384 = pneg %p103
        $region34: #{downsample.1} parent=31 // pred_check_branch
          %386 = sbr.rel (%p384) target = $region36
        $region35: #{downsample.1} parent=31 // pred_region
          %s387 = smul.u32 8, %s17
          %s389 = ssub.s32 1024, 1024
          %390 = vsyncadd %s380, %s389
          %s391 = smul.addr %s387, 128
          %s392 = scalar_lea.hbm %s3, %s391
          %s393 = sshll.u32 %s383, 4
          %s394 = int_to_ptr.vmem [resolvable:$true] %s393
          %399 = dma.vmem_to_hbm [thread:$0]  %s394, 1024, %s392, %s380, 128, 128, 8
        $region36: #{downsample.1} parent=31 // pred_fallthru
          _
      $region32: #{downsample.1} parent=5 // pred_fallthru
        _
      %p400 = scmp.le.s32.totalorder 2, %s12
      // Predicated region
      $region37: #{downsample.1} parent=5 // pred_check
        %p401 = pneg %p400
      $region38: #{downsample.1} parent=5 // pred_check_branch
        %403 = sbr.rel (%p401) target = $region40
      $region39: #{downsample.1} parent=5 // pred_region
        %s404 = ssub.s32 %s12, 2
        // Predicated region
        $region41: #{downsample.1} parent=39 // pred_check
          %p405 = pneg %p109
        $region42: #{downsample.1} parent=39 // pred_check_branch
          %407 = sbr.rel (%p405) target = $region44
        $region43: #{downsample.1} parent=39 // pred_region
          %s408 = sand.u32 %s94, 1
          %s409 = scalar_lea.sflag [#allocation3], %s408
          %s410 = sand.u32 %s94, 1
          %s411 = smul.addr %s410, 64
          %s412 = scalar_lea.vmem [#allocation2], %s411
          %413 = dma.done %s409, 1024
        $region44: #{downsample.1} parent=39 // pred_fallthru
          _
      $region40: #{downsample.1} parent=5 // pred_fallthru
        _
    $region6: #{downsample.1} parent=1 // loop_footer
      %s16 = sadd.s32 1, %s12
    $region7: #{downsample.1} parent=1 // loop_footer_branch
      %11 = sbr.rel target = $region3
    $region8: #{downsample.1} parent=1 // loop_exit
      _
    %414 = vsyncpa [#allocation3], 1
    %s415 = scalar_lea.sflag [#allocation3], 1
    %416 = vsyncpa %s415, 1

</llo_original>
